<compile_context>
chip_gen: v7x
topology: tpu7x:2x2x1
jax: 0.10.0
libtpu: 0.0.40
codegen_flags: <defaults>
</compile_context>

<pallas_src>
import functools

import jax
import jax.numpy as jnp
from jax.experimental import pallas as pl
from jax.experimental.pallas import tpu as pltpu

LANE = 128


def _round_up(x, m):
    return ((x + m - 1) // m) * m


def _pick_vmem_limit_bytes():
    """Per-generation scoped-VMEM cap: leave headroom on 64-MiB v7x, use most
    of the 128 MiB on v5e/v6e."""
    cap = 128 * 1024 * 1024
    try:
        info = pltpu.get_tpu_info()
        cap = int(getattr(info, "vmem_capacity_bytes", cap) or cap)
    except Exception:
        pass
    if cap <= 64 * 1024 * 1024:          # v7x
        return 48 * 1024 * 1024
    return 100 * 1024 * 1024             # v5e / v6e


def _pick_batch_tile(B):
    """Prefer >=2 tiles on the parallel axis (v7x 2-TC sharding) with a
    sublane-friendly (multiple-of-8) tile; fall back to the whole batch."""
    for bt in (512, 256, 128, 64, 32, 16, 8):
        if B % bt == 0 and B // bt >= 2:
            return bt
    return B


def _pick_patch_chunk(N, BT, pd, d, step_budget_bytes=24 * 1024 * 1024):
    """Largest divisor of N (preferring multiples of 16 for bf16 sublane
    packing) whose per-step footprint (double-buffered bf16 patches tile +
    f32 post-matmul intermediate) fits the budget."""
    def bytes_per_step(c):
        return BT * c * (4 * pd + 4 * d)
    divs = [c for c in range(1, N + 1) if N % c == 0]
    for pref in (lambda c: c % 16 == 0,
                 lambda c: c % 8 == 0 or c == N):
        cands = [c for c in divs if pref(c) and bytes_per_step(c) <= step_budget_bytes]
        if cands:
            return max(cands)
    return N


# ----------------------------- Pallas kernels ------------------------------ #

def _fused_encoder_head_kernel(patches_ref, w1_ref, b1_ref, wc_ref, bc_ref,
                               feats_ref, logits_ref, *, inv_n):
    """Fused image_encoder + classification_head.

    Grid = (batch_tiles, patch_chunks); patch_chunks is the reduction axis.

    patches: (BT, NC, PD)   bf16  flattened patches (true, unpadded PD)
    w1:      (PD, D)        bf16  patch-embedding weight (resident)
    b1:      (1, D)         f32   patch-embedding bias (resident)
    wc:      (D, NCLp)      bf16  head weight, class dim padded to 128 (resident)
    bc:      (1, NCLp)      f32   head bias, padded (resident)
    feats:   (BT, D)        f32   pooled features; doubles as the accumulator
                                  (index_map constant in j -> VMEM-resident)
    logits:  (BT, NCLp)     f32   padded logits (written at the last j only)
    """
    j = pl.program_id(1)
    nj = pl.num_programs(1)

    @pl.when(j == 0)
    def _():
        feats_ref[...] = jnp.zeros_like(feats_ref)

    bt, nc, pd = patches_ref.shape
    # One lane-dense 2-D MXU matmul: (BT*NC, PD) x (PD, D), f32 accumulation.
    p2d = patches_ref[...].reshape(bt * nc, pd)
    h = jnp.dot(p2d, w1_ref[...], preferred_element_type=jnp.float32)
    h = jnp.maximum(h + b1_ref[...], 0.0)                 # bias + ReLU (f32 VPU)
    # Pool-sum over the patch axis, accumulate into the resident output block.
    feats_ref[...] += jnp.sum(h.reshape(bt, nc, -1), axis=1)

    @pl.when(j == nj - 1)
    def _():
        feats = feats_ref[...] * inv_n                     # finalize mean pool
        feats_ref[...] = feats
        # classification head: L2-normalize + Linear
        inv_norm = jax.lax.rsqrt(
            jnp.sum(feats * feats, axis=-1, keepdims=True) + 1e-12)
        fn = (feats * inv_norm).astype(wc_ref.dtype)
        logits_ref[...] = (
            jnp.dot(fn, wc_ref[...], preferred_element_type=jnp.float32)
            + bc_ref[...])


def _head_only_kernel(feats_ref, wc_ref, bc_ref, logits_ref):
    """Standalone classification head (process_images=False path)."""
    f = feats_ref[...].astype(jnp.float32)
    inv_norm = jax.lax.rsqrt(jnp.sum(f * f, axis=-1, keepdims=True) + 1e-12)
    fn = (f * inv_norm).astype(wc_ref.dtype)
    logits_ref[...] = (
        jnp.dot(fn, wc_ref[...], preferred_element_type=jnp.float32)
        + bc_ref[...])


# ------------------------------ JAX wrappers ------------------------------- #

def prepare_params(params, num_classes):
    """Cast MXU weights to bf16; pad ONLY the class dim to lane width (128)."""
    w1 = params['w1']                                   # (PD, D)
    pd, d = w1.shape
    nclp = _round_up(num_classes, LANE)
    wc = params['wc']                                   # (D, num_classes)
    bc = params['bc']                                   # (1, num_classes)
    return {
        'w1_b': w1.astype(jnp.bfloat16),
        'b1': params['b1'].astype(jnp.float32),
        'wc_p': jnp.pad(wc, ((0, 0), (0, nclp - wc.shape[1]))).astype(jnp.bfloat16),
        'bc_p': jnp.pad(bc, ((0, 0), (0, nclp - bc.shape[1]))).astype(jnp.float32),
        'pd': pd, 'd': d, 'num_classes': num_classes, 'nclp': nclp,
    }


def forward_fused(x_nchw, prep, patch=4, batch_tile=None, patch_chunk=None):
    """image_encoder + classification_head in one pallas_call.

    Returns (feats (B, D) f32, logits (B, num_classes) f32).
    """
    B, C, H, W = x_nchw.shape
    P = patch
    nH, nW = H // P, W // P
    N = nH * nW
    pd, D = prep['pd'], prep['d']
    num_classes, nclp = prep['num_classes'], prep['nclp']
    assert pd == C * P * P

    if batch_tile is None:
        batch_tile = _pick_batch_tile(B)
    BT = batch_tile
    assert B % BT == 0 and (BT % 8 == 0 or BT == B), "bad batch_tile"
    if patch_chunk is None:
        patch_chunk = _pick_patch_chunk(N, BT, pd, D)
    NC = patch_chunk
    assert N % NC == 0 and (NC % 8 == 0 or NC == N), "bad patch_chunk"

    # Patchify (layout glue, no compute): (B,C,H,W) -> (B, N, PD), bf16,
    # unpadded last dim.  Stays inside the caller's jit so it fuses with the
    # pallas_call's operand preparation.
    # TODO(synk): gather patches inside the kernel via manual DMA at real
    # image sizes to remove this HBM round-trip.
    patches = (x_nchw.reshape(B, C, nH, P, nW, P)
               .transpose(0, 2, 4, 1, 3, 5)
               .reshape(B, N, pd)).astype(jnp.bfloat16)

    grid = (B // BT, N // NC)
    kernel = functools.partial(_fused_encoder_head_kernel, inv_n=1.0 / N)

    feats, logits_p = pl.pallas_call(
        kernel,
        out_shape=(jax.ShapeDtypeStruct((B, D), jnp.float32),
                   jax.ShapeDtypeStruct((B, nclp), jnp.float32)),
        grid_spec=pltpu.PrefetchScalarGridSpec(
            num_scalar_prefetch=0,
            grid=grid,
            in_specs=[
                pl.BlockSpec((BT, NC, pd), lambda i, j: (i, j, 0)),  # patches tile
                pl.BlockSpec((pd, D), lambda i, j: (0, 0)),          # w1 resident
                pl.BlockSpec((1, D), lambda i, j: (0, 0)),           # b1 resident
                pl.BlockSpec((D, nclp), lambda i, j: (0, 0)),        # wc resident
                pl.BlockSpec((1, nclp), lambda i, j: (0, 0)),        # bc resident
            ],
            out_specs=[
                pl.BlockSpec((BT, D), lambda i, j: (i, 0)),          # feats (acc)
                pl.BlockSpec((BT, nclp), lambda i, j: (i, 0)),       # logits
            ],
        ),
        compiler_params=pltpu.CompilerParams(
            dimension_semantics=("parallel", "arbitrary"),
            vmem_limit_bytes=_pick_vmem_limit_bytes(),
        ),
    )(patches, prep['w1_b'], prep['b1'], prep['wc_p'], prep['bc_p'])

    return feats, logits_p[:, :num_classes]


def forward_cls_head(feats, prep, batch_tile=None):
    """classification_head alone: (B, D) features -> (B, num_classes) logits."""
    B, D = feats.shape
    num_classes, nclp = prep['num_classes'], prep['nclp']
    if batch_tile is None:
        batch_tile = _pick_batch_tile(B)
    BT = batch_tile
    assert B % BT == 0 and (BT % 8 == 0 or BT == B)
    logits_p = pl.pallas_call(
        _head_only_kernel,
        out_shape=jax.ShapeDtypeStruct((B, nclp), jnp.float32),
        grid_spec=pltpu.PrefetchScalarGridSpec(
            num_scalar_prefetch=0,
            grid=(B // BT,),
            in_specs=[
                pl.BlockSpec((BT, D), lambda i: (i, 0)),
                pl.BlockSpec((D, nclp), lambda i: (0, 0)),
                pl.BlockSpec((1, nclp), lambda i: (0, 0)),
            ],
            out_specs=pl.BlockSpec((BT, nclp), lambda i: (i, 0)),
        ),
        compiler_params=pltpu.CompilerParams(
            dimension_semantics=("parallel",),
            vmem_limit_bytes=_pick_vmem_limit_bytes(),
        ),
    )(feats.astype(jnp.float32), prep['wc_p'], prep['bc_p'])
    return logits_p[:, :num_classes]


def image_classifier_forward(inputs, prep, process_images=True,
                             return_mid_feats=False, patch=4,
                             batch_tile=None, patch_chunk=None):
    """Mirrors ImageClassifier.forward semantics."""
    if process_images:
        feats, logits = forward_fused(inputs, prep, patch=patch,
                                      batch_tile=batch_tile,
                                      patch_chunk=patch_chunk)
        if return_mid_feats:
            return feats, logits
        return logits
    logits = forward_cls_head(inputs, prep)
    if return_mid_feats:
        return inputs, logits
    return logits


# --------------------------------- main ------------------------------------ #

def _reference_forward(x, params, P):
    """Pure-JAX f32 reference."""
    B, C, H, W = x.shape
    pd = C * P * P
    patches = (x.reshape(B, C, H // P, P, W // P, P)
               .transpose(0, 2, 4, 1, 3, 5)
               .reshape(B, -1, pd))
    h = jnp.maximum(jnp.einsum('bnp,pd->bnd', patches, params['w1'])
                    + params['b1'], 0.0)
    f = jnp.mean(h, axis=1)
    fn = f * jax.lax.rsqrt(jnp.sum(f * f, axis=-1, keepdims=True) + 1e-12)
    return f, fn @ params['wc'] + params['bc']


if __name__ == "__main__":
    key = jax.random.PRNGKey(0)
    k_x, k_x2, k_w1, k_b1, k_wc, k_bc = jax.random.split(key, 6)

    # small shapes: batch=2, channels=4, spatial=16, patch=4
    B, C, H, W = 2, 4, 16, 16
    P = 4
    patch_dim = C * P * P          # 64
    embed_dim = 128
    num_classes = 10

    x = jax.random.normal(k_x, (B, C, H, W), dtype=jnp.float32)

    params = {
        'w1': (jax.random.normal(k_w1, (patch_dim, embed_dim), jnp.float32)
               * (1.0 / jnp.sqrt(patch_dim))),
        'b1': jax.random.normal(k_b1, (1, embed_dim), jnp.float32) * 0.02,
        'wc': (jax.random.normal(k_wc, (embed_dim, num_classes), jnp.float32)
               * (1.0 / jnp.sqrt(embed_dim))),
        'bc': jnp.zeros((1, num_classes), jnp.float32),
    }
    prep = prepare_params(params, num_classes)

    # Fused path (patchify + kernel under one jit so the layout glue fuses).
    fwd = jax.jit(functools.partial(image_classifier_forward, prep=prep,
                                    process_images=True, return_mid_feats=True,
                                    patch=P))
    feats, logits = fwd(x)
    jax.block_until_ready((feats, logits))
    assert feats.shape == (B, embed_dim)
    assert logits.shape == (B, num_classes)

    f_ref, l_ref = _reference_forward(x, params, P)
    assert jnp.allclose(feats, f_ref, atol=1e-1, rtol=1e-1)
    assert jnp.allclose(logits, l_ref, atol=1e-1, rtol=1e-1)

    # process_images=False path (pre-computed features -> head only)
    logits_h = image_classifier_forward(feats, prep, process_images=False)
    jax.block_until_ready(logits_h)
    assert logits_h.shape == (B, num_classes)
    assert jnp.allclose(logits_h, l_ref, atol=1e-1, rtol=1e-1)

    # Larger run exercising >=2 batch tiles (v7x parallel axis) and a
    # multi-step reduction with NC=16 (bf16-sublane-aligned accumulator path).
    B2, H2, W2 = 16, 32, 32
    x2 = jax.random.normal(k_x2, (B2, C, H2, W2), dtype=jnp.float32)
    fwd2 = jax.jit(functools.partial(image_classifier_forward, prep=prep,
                                     process_images=True, return_mid_feats=True,
                                     patch=P, patch_chunk=16))
    feats2, logits2 = fwd2(x2)
    jax.block_until_ready((feats2, logits2))
    assert feats2.shape == (B2, embed_dim)
    assert logits2.shape == (B2, num_classes)
    f2_ref, l2_ref = _reference_forward(x2, params, P)
    assert jnp.allclose(feats2, f2_ref, atol=1e-1, rtol=1e-1)
    assert jnp.allclose(logits2, l2_ref, atol=1e-1, rtol=1e-1)

    print("KERNEL_OK")
</pallas_src>

<mosaic_0001>
module attributes {stable_mosaic.version = 11 : i64} {
  func.func @_fused_encoder_head_kernel(%arg0: i32, %arg1: i32, %arg2: memref<2x16x64xbf16, #tpu.memory_space<vmem>>, %arg3: memref<64x128xbf16, #tpu.memory_space<vmem>>, %arg4: memref<1x128xf32, #tpu.memory_space<vmem>>, %arg5: memref<128x128xbf16, #tpu.memory_space<vmem>>, %arg6: memref<1x128xf32, #tpu.memory_space<vmem>>, %arg7: memref<2x128xf32, #tpu.memory_space<vmem>>, %arg8: memref<2x128xf32, #tpu.memory_space<vmem>>) attributes {dimension_semantics = [#tpu.dimension_semantics<parallel>, #tpu.dimension_semantics<arbitrary>], iteration_bounds = array<i64: 1, 1>, scalar_prefetch = 0 : i64, scratch_operands = 0 : i64, tpu.core_type = #tpu.core_type<tc>, window_params = [{transform_indices = @transform_0, window_bounds = array<i64: 2, 16, 64>}, {pipeline_mode = #tpu.pipeline_mode<synchronous>, transform_indices = @transform_1, window_bounds = array<i64: 64, 128>}, {pipeline_mode = #tpu.pipeline_mode<synchronous>, transform_indices = @transform_2, window_bounds = array<i64: 1, 128>}, {pipeline_mode = #tpu.pipeline_mode<synchronous>, transform_indices = @transform_3, window_bounds = array<i64: 128, 128>}, {pipeline_mode = #tpu.pipeline_mode<synchronous>, transform_indices = @transform_4, window_bounds = array<i64: 1, 128>}, {transform_indices = @transform_5, window_bounds = array<i64: 2, 128>}, {transform_indices = @transform_6, window_bounds = array<i64: 2, 128>}]} {
    %c0_i32 = arith.constant 0 : i32
    %0 = arith.cmpi eq, %arg1, %c0_i32 : i32
    %1 = arith.extui %0 : i1 to i32
    %c0_i32_0 = arith.constant 0 : i32
    %2 = arith.cmpi ne, %1, %c0_i32_0 : i32
    scf.if %2 {
      %cst_15 = arith.constant 0.000000e+00 : f32
      %20 = vector.broadcast %cst_15 : f32 to vector<2x128xf32>
      %c0_16 = arith.constant 0 : index
      %c0_17 = arith.constant 0 : index
      %21 = vector.load %arg7[%c0_16, %c0_17] : memref<2x128xf32, #tpu.memory_space<vmem>>, vector<2x128xf32>
      tpu.vector_store %arg7[%c0_16, %c0_17], %20 {strides = array<i32>} : memref<2x128xf32, #tpu.memory_space<vmem>>, vector<2x128xf32>,
    } else {
    }
    %c0 = arith.constant 0 : index
    %c0_1 = arith.constant 0 : index
    %c0_2 = arith.constant 0 : index
    %3 = vector.load %arg2[%c0, %c0_1, %c0_2] : memref<2x16x64xbf16, #tpu.memory_space<vmem>>, vector<2x16x64xbf16>
    %4 = vector.shape_cast %3 : vector<2x16x64xbf16> to vector<32x64xbf16>
    %c0_3 = arith.constant 0 : index
    %c0_4 = arith.constant 0 : index
    %5 = vector.load %arg3[%c0_3, %c0_4] : memref<64x128xbf16, #tpu.memory_space<vmem>>, vector<64x128xbf16>
    %cst = arith.constant dense<0.000000e+00> : vector<32x128xf32>
    %6 = tpu.matmul %4, %5, %cst {dimension_numbers = #tpu.dot_dimension_numbers<[1], [0], [0], [1], [0, 0, 1, 1], [], []>} : vector<32x64xbf16>, vector<64x128xbf16>, vector<32x128xf32> -> vector<32x128xf32>
    %c0_5 = arith.constant 0 : index
    %c0_6 = arith.constant 0 : index
    %7 = vector.load %arg4[%c0_5, %c0_6] : memref<1x128xf32, #tpu.memory_space<vmem>>, vector<1x128xf32>
    %8 = vector.broadcast %7 : vector<1x128xf32> to vector<32x128xf32>
    %9 = arith.addf %6, %8 : vector<32x128xf32>
    %cst_7 = arith.constant 0.000000e+00 : f32
    %10 = vector.broadcast %cst_7 : f32 to vector<32x128xf32>
    %11 = arith.maximumf %9, %10 : vector<32x128xf32>
    %c0_8 = arith.constant 0 : index
    %c0_9 = arith.constant 0 : index
    %12 = vector.load %arg7[%c0_8, %c0_9] : memref<2x128xf32, #tpu.memory_space<vmem>>, vector<2x128xf32>
    %13 = vector.shape_cast %11 : vector<32x128xf32> to vector<2x16x128xf32>
    %cst_10 = arith.constant dense<0.000000e+00> : vector<2x128xf32>
    %14 = vector.multi_reduction <add>, %13, %cst_10 [1] : vector<2x16x128xf32> to vector<2x128xf32>
    %15 = arith.addf %12, %14 : vector<2x128xf32>
    %c0_11 = arith.constant 0 : index
    %c0_12 = arith.constant 0 : index
    %16 = vector.load %arg7[%c0_11, %c0_12] : memref<2x128xf32, #tpu.memory_space<vmem>>, vector<2x128xf32>
    tpu.vector_store %arg7[%c0_11, %c0_12], %15 {strides = array<i32>} : memref<2x128xf32, #tpu.memory_space<vmem>>, vector<2x128xf32>,
    %c0_i32_13 = arith.constant 0 : i32
    %17 = arith.cmpi eq, %arg1, %c0_i32_13 : i32
    %18 = arith.extui %17 : i1 to i32
    %c0_i32_14 = arith.constant 0 : i32
    %19 = arith.cmpi ne, %18, %c0_i32_14 : i32
    scf.if %19 {
      %c0_15 = arith.constant 0 : index
      %c0_16 = arith.constant 0 : index
      %20 = vector.load %arg7[%c0_15, %c0_16] : memref<2x128xf32, #tpu.memory_space<vmem>>, vector<2x128xf32>
      %cst_17 = arith.constant 6.250000e-02 : f32
      %21 = vector.broadcast %cst_17 : f32 to vector<2x128xf32>
      %22 = arith.mulf %20, %21 : vector<2x128xf32>
      %c0_18 = arith.constant 0 : index
      %c0_19 = arith.constant 0 : index
      %23 = vector.load %arg7[%c0_18, %c0_19] : memref<2x128xf32, #tpu.memory_space<vmem>>, vector<2x128xf32>
      tpu.vector_store %arg7[%c0_18, %c0_19], %22 {strides = array<i32>} : memref<2x128xf32, #tpu.memory_space<vmem>>, vector<2x128xf32>,
      %24 = arith.mulf %22, %22 : vector<2x128xf32>
      %cst_20 = arith.constant dense<0.000000e+00> : vector<2xf32>
      %25 = vector.multi_reduction <add>, %24, %cst_20 [1] : vector<2x128xf32> to vector<2xf32>
      %26 = vector.shape_cast %25 : vector<2xf32> to vector<2x1xf32>
      %cst_21 = arith.constant 9.99999996E-13 : f32
      %27 = vector.broadcast %cst_21 : f32 to vector<2x1xf32>
      %28 = arith.addf %26, %27 : vector<2x1xf32>
      %29 = math.rsqrt %28 : vector<2x1xf32>
      %30 = vector.broadcast %29 : vector<2x1xf32> to vector<2x128xf32>
      %31 = arith.mulf %22, %30 : vector<2x128xf32>
      %32 = arith.truncf %31 : vector<2x128xf32> to vector<2x128xbf16>
      %c0_22 = arith.constant 0 : index
      %c0_23 = arith.constant 0 : index
      %33 = vector.load %arg5[%c0_22, %c0_23] : memref<128x128xbf16, #tpu.memory_space<vmem>>, vector<128x128xbf16>
      %cst_24 = arith.constant dense<0.000000e+00> : vector<2x128xf32>
      %34 = tpu.matmul %32, %33, %cst_24 {dimension_numbers = #tpu.dot_dimension_numbers<[1], [0], [0], [1], [0, 0, 1, 1], [], []>} : vector<2x128xbf16>, vector<128x128xbf16>, vector<2x128xf32> -> vector<2x128xf32>
      %c0_25 = arith.constant 0 : index
      %c0_26 = arith.constant 0 : index
      %35 = vector.load %arg6[%c0_25, %c0_26] : memref<1x128xf32, #tpu.memory_space<vmem>>, vector<1x128xf32>
      %36 = vector.broadcast %35 : vector<1x128xf32> to vector<2x128xf32>
      %37 = arith.addf %34, %36 : vector<2x128xf32>
      %c0_27 = arith.constant 0 : index
      %c0_28 = arith.constant 0 : index
      %38 = vector.load %arg8[%c0_27, %c0_28] : memref<2x128xf32, #tpu.memory_space<vmem>>, vector<2x128xf32>
      tpu.vector_store %arg8[%c0_27, %c0_28], %37 {strides = array<i32>} : memref<2x128xf32, #tpu.memory_space<vmem>>, vector<2x128xf32>,
    } else {
    }
    return
  }
  func.func @transform_0(%arg0: i32, %arg1: i32) -> (i32, i32, i32) {
    %c0_i32 = arith.constant 0 : i32
    %c0_i32_0 = arith.constant 0 : i32
    return %arg0, %arg1, %c0_i32 : i32, i32, i32
  }
  func.func @transform_1(%arg0: i32, %arg1: i32) -> (i32, i32) {
    %c0_i32 = arith.constant 0 : i32
    %c0_i32_0 = arith.constant 0 : i32
    %c0_i32_1 = arith.constant 0 : i32
    return %c0_i32, %c0_i32_0 : i32, i32
  }
  func.func @transform_2(%arg0: i32, %arg1: i32) -> (i32, i32) {
    %c0_i32 = arith.constant 0 : i32
    %c0_i32_0 = arith.constant 0 : i32
    %c0_i32_1 = arith.constant 0 : i32
    return %c0_i32, %c0_i32_0 : i32, i32
  }
  func.func @transform_3(%arg0: i32, %arg1: i32) -> (i32, i32) {
    %c0_i32 = arith.constant 0 : i32
    %c0_i32_0 = arith.constant 0 : i32
    %c0_i32_1 = arith.constant 0 : i32
    return %c0_i32, %c0_i32_0 : i32, i32
  }
  func.func @transform_4(%arg0: i32, %arg1: i32) -> (i32, i32) {
    %c0_i32 = arith.constant 0 : i32
    %c0_i32_0 = arith.constant 0 : i32
    %c0_i32_1 = arith.constant 0 : i32
    return %c0_i32, %c0_i32_0 : i32, i32
  }
  func.func @transform_5(%arg0: i32, %arg1: i32) -> (i32, i32) {
    %c0_i32 = arith.constant 0 : i32
    %c0_i32_0 = arith.constant 0 : i32
    return %arg0, %c0_i32 : i32, i32
  }
  func.func @transform_6(%arg0: i32, %arg1: i32) -> (i32, i32) {
    %c0_i32 = arith.constant 0 : i32
    %c0_i32_0 = arith.constant 0 : i32
    return %arg0, %c0_i32 : i32, i32
  }
}

</mosaic_0001>

<llo_original>
// kernel: image_classifier_forward.1
$region0: #{image_classifier_forward.1}
  #allocation0 [shape = 'u32[]', space=smem, size = 0x4, offset = 0x4, fixed_abs, tag = 'smem constant byte address 0x4 - core index']
  #allocation1 [shape = 'u32[144,128]{1,0:T(1,128)}', space=vmem, size = 0x12000, scoped, tag = 'internal scratch']
  %s0 = inlined_call_operand.hbm [shape: bf16[2,16,64], index: 0, kind: input, shape index: {}]
  %s1 = inlined_call_operand.hbm [shape: bf16[64,128], index: 1, kind: input, shape index: {}]
  %s2 = inlined_call_operand.hbm [shape: f32[1,128], index: 2, kind: input, shape index: {}]
  %s3 = inlined_call_operand.hbm [shape: bf16[128,128], index: 3, kind: input, shape index: {}]
  %s4 = inlined_call_operand.hbm [shape: f32[1,128], index: 4, kind: input, shape index: {}]
  %s5 = inlined_call_operand.hbm [shape: f32[2,128], index: 5, kind: output, shape index: {0}]
  %s6 = inlined_call_operand.hbm [shape: f32[2,128], index: 6, kind: output, shape index: {1}]
  %7 = xla_tuple %s5, %s6
  %s8 = sld [smem:[#allocation0]]
  $region66: #{image_classifier_forward.1} parent=0
    _
  %s10 = ssub.s32 1, %s8
  %s11 = scalar_select 0, %s10, %s8
  $region1: #{image_classifier_forward.1} parent=0
    #allocation2 [shape = 'u8[8192]{0}', space=vmem, size = 0x2000, scoped, tag = 'input window, operand 0, single buffered']
    #allocation3 [shape = 's32[1]{0}', space=sflag, size = 0x4, scoped, tag = 'scoped memory for image_classifier_forward.1']
    #allocation4 [shape = 's32[1]{0}', space=sflag, size = 0x4, scoped, tag = 'scoped memory for image_classifier_forward.1']
    #allocation5 [shape = 'u8[16384]{0}', space=vmem, size = 0x4000, scoped, tag = 'input window, operand 1, single buffered']
    #allocation6 [shape = 's32[1]{0}', space=sflag, size = 0x4, scoped, tag = 'scoped memory for image_classifier_forward.1']
    #allocation7 [shape = 'u8[512]{0}', space=vmem, size = 0x400, scoped, tag = 'input window, operand 2, single buffered']
    #allocation8 [shape = 'u8[32768]{0}', space=vmem, size = 0x8000, scoped, tag = 'input window, operand 3, single buffered']
    #allocation9 [shape = 's32[1]{0}', space=sflag, size = 0x4, scoped, tag = 'scoped memory for image_classifier_forward.1']
    #allocation10 [shape = 'u8[512]{0}', space=vmem, size = 0x400, scoped, tag = 'input window, operand 4, single buffered']
    #allocation11 [shape = 'u8[1024]{0}', space=vmem, size = 0x400, scoped, tag = 'output window, operand 0, single buffered']
    #allocation12 [shape = 'u8[1024]{0}', space=vmem, size = 0x400, scoped, tag = 'output window, operand 1, single buffered']
    #allocation13 [shape = 's32[1]{0}', space=sflag, size = 0x4, scoped, tag = 'scoped memory for image_classifier_forward.1']
    %12 = vsyncpa [#allocation3], 0
    %13 = vsyncpa [#allocation6], 0
    %14 = vsyncpa [#allocation9], 0
    %15 = vsyncpa [#allocation4], 0
    %16 = vsyncpa [#allocation13], 0
    // Predicated region
    $region2: #{image_classifier_forward.1} parent=1 // pred_check
      _
    $region3: #{image_classifier_forward.1} parent=1 // pred_check_branch
      %18 = sbr.rel (0) target = $region5
    $region4: #{image_classifier_forward.1} parent=1 // pred_region
      %s20 = ssub.s32 256, 256
      %21 = vsyncadd [#allocation3], %s20
      %s22 = sshll.u32 [#allocation2], 4
      %s23 = int_to_ptr.vmem [resolvable:$true] %s22
      %28 = dma.hbm_to_vmem [thread:$0]  %s0, 256, %s23, [#allocation3], 64, 64, 4
    $region5: #{image_classifier_forward.1} parent=1 // pred_fallthru
      _
    // Predicated region
    $region6: #{image_classifier_forward.1} parent=1 // pred_check
      _
    $region7: #{image_classifier_forward.1} parent=1 // pred_check_branch
      %30 = sbr.rel (0) target = $region9
    $region8: #{image_classifier_forward.1} parent=1 // pred_region
      %s32 = ssub.s32 512, 512
      %33 = vsyncadd [#allocation6], %s32
      %s34 = sshll.u32 [#allocation5], 4
      %s35 = int_to_ptr.vmem [resolvable:$true] %s34
      %40 = dma.hbm_to_vmem [thread:$0]  %s1, 512, %s35, [#allocation6], 64, 64, 4
    $region9: #{image_classifier_forward.1} parent=1 // pred_fallthru
      _
    // Predicated region
    $region10: #{image_classifier_forward.1} parent=1 // pred_check
      _
    $region11: #{image_classifier_forward.1} parent=1 // pred_check_branch
      %42 = sbr.rel (0) target = $region13
    $region12: #{image_classifier_forward.1} parent=1 // pred_region
      %s44 = ssub.s32 16, 16
      %45 = vsyncadd [#allocation6], %s44
      %s47 = sshll.u32 [#allocation7], 4
      %s48 = int_to_ptr.vmem [resolvable:$true] %s47
      %50 = dma.hbm_to_vmem [thread:$0]  %s2, 16, %s48, [#allocation6]
    $region13: #{image_classifier_forward.1} parent=1 // pred_fallthru
      _
    // Predicated region
    $region14: #{image_classifier_forward.1} parent=1 // pred_check
      _
    $region15: #{image_classifier_forward.1} parent=1 // pred_check_branch
      %52 = sbr.rel (0) target = $region17
    $region16: #{image_classifier_forward.1} parent=1 // pred_region
      %s54 = ssub.s32 1024, 1024
      %55 = vsyncadd [#allocation9], %s54
      %s56 = sshll.u32 [#allocation8], 4
      %s57 = int_to_ptr.vmem [resolvable:$true] %s56
      %62 = dma.hbm_to_vmem [thread:$0]  %s3, 1024, %s57, [#allocation9], 64, 64, 4
    $region17: #{image_classifier_forward.1} parent=1 // pred_fallthru
      _
    // Predicated region
    $region18: #{image_classifier_forward.1} parent=1 // pred_check
      _
    $region19: #{image_classifier_forward.1} parent=1 // pred_check_branch
      %64 = sbr.rel (0) target = $region21
    $region20: #{image_classifier_forward.1} parent=1 // pred_region
      %s66 = ssub.s32 16, 16
      %67 = vsyncadd [#allocation9], %s66
      %s69 = sshll.u32 [#allocation10], 4
      %s70 = int_to_ptr.vmem [resolvable:$true] %s69
      %72 = dma.hbm_to_vmem [thread:$0]  %s4, 16, %s70, [#allocation9]
    $region21: #{image_classifier_forward.1} parent=1 // pred_fallthru
      _
    // Predicated region
    $region22: #{image_classifier_forward.1} parent=1 // pred_check
      _
    $region23: #{image_classifier_forward.1} parent=1 // pred_check_branch
      %74 = sbr.rel (0) target = $region25
    $region24: #{image_classifier_forward.1} parent=1 // pred_region
      %75 = dma.done [#allocation3], 256
    $region25: #{image_classifier_forward.1} parent=1 // pred_fallthru
      _
    // Predicated region
    $region26: #{image_classifier_forward.1} parent=1 // pred_check
      _
    $region27: #{image_classifier_forward.1} parent=1 // pred_check_branch
      %77 = sbr.rel (0) target = $region29
    $region28: #{image_classifier_forward.1} parent=1 // pred_region
      %78 = dma.done [#allocation6], 512
    $region29: #{image_classifier_forward.1} parent=1 // pred_fallthru
      _
    // Predicated region
    $region30: #{image_classifier_forward.1} parent=1 // pred_check
      _
    $region31: #{image_classifier_forward.1} parent=1 // pred_check_branch
      %80 = sbr.rel (0) target = $region33
    $region32: #{image_classifier_forward.1} parent=1 // pred_region
      %81 = dma.done [#allocation6], 16
    $region33: #{image_classifier_forward.1} parent=1 // pred_fallthru
      _
    // Predicated region
    $region34: #{image_classifier_forward.1} parent=1 // pred_check
      _
    $region35: #{image_classifier_forward.1} parent=1 // pred_check_branch
      %83 = sbr.rel (0) target = $region37
    $region36: #{image_classifier_forward.1} parent=1 // pred_region
      %84 = dma.done [#allocation9], 1024
    $region37: #{image_classifier_forward.1} parent=1 // pred_fallthru
      _
    // Predicated region
    $region38: #{image_classifier_forward.1} parent=1 // pred_check
      _
    $region39: #{image_classifier_forward.1} parent=1 // pred_check_branch
      %86 = sbr.rel (0) target = $region41
    $region40: #{image_classifier_forward.1} parent=1 // pred_region
      %87 = dma.done [#allocation9], 16
    $region41: #{image_classifier_forward.1} parent=1 // pred_fallthru
      _
    %p89 = scmp.eq.s32.totalorder 0, 0
    // Predicated region
    $region42: #{image_classifier_forward.1} parent=1 // pred_check
      %p90 = pneg %p89
    $region43: #{image_classifier_forward.1} parent=1 // pred_check_branch
      %92 = sbr.rel (%p90) target = $region45
    $region44: #{image_classifier_forward.1} parent=1 // pred_region
      %93 = vst [vmem:[#allocation11] sm:$0x3] 0.0
    $region45: #{image_classifier_forward.1} parent=1 // pred_fallthru
      _
    %v94 = vld [vmem:[#allocation2] sm:$0xf]
    %v95 = vld [vmem:[#allocation2 + $0x4] sm:$0xf]
    %v96 = vld [vmem:[#allocation2 + $0x8] sm:$0xf]
    %v97 = vld [vmem:[#allocation2 + $0xc] sm:$0xf]
    %v98 = vld [vmem:[#allocation5] sm:$0xf]
    %v99 = vld [vmem:[#allocation5 + $0x4] sm:$0xf]
    %v100 = vld [vmem:[#allocation5 + $0x8] sm:$0xf]
    %v101 = vld [vmem:[#allocation5 + $0xc] sm:$0xf]
    %v102 = vld [vmem:[#allocation5 + $0x10] sm:$0xf]
    %v103 = vld [vmem:[#allocation5 + $0x14] sm:$0xf]
    %v104 = vld [vmem:[#allocation5 + $0x18] sm:$0xf]
    %v105 = vld [vmem:[#allocation5 + $0x1c] sm:$0xf]
    %v106 = vld [vmem:[#allocation7] sm:$0x1]
    %v108 = vlaneseq
    %v109 = vshrl.u32 %v108, 7
    %v110 = vsub.s32 0, %v109
    %v111 = vrot.slane %v106, %v110
    %v117 = vunpack.c.l.b16 %v94
    %v118 = vunpack.c.l.b16 %v95
    %v119 = vunpack.c.l.b16 %v96
    %v120 = vunpack.c.l.b16 %v97
    %v121 = vpack.c.b16 %v118, %v117
    %v122 = vpack.c.b16 %v120, %v119
    %v131 = vunpack.c.l.b16 %v98
    %v132 = vunpack.c.l.b16 %v99
    %v133 = vunpack.c.l.b16 %v100
    %v134 = vunpack.c.l.b16 %v101
    %v135 = vunpack.c.l.b16 %v102
    %v136 = vunpack.c.l.b16 %v103
    %v137 = vunpack.c.l.b16 %v104
    %v138 = vunpack.c.l.b16 %v105
    %v139 = vpack.c.b16 %v132, %v131
    %v140 = vpack.c.b16 %v134, %v133
    %v141 = vpack.c.b16 %v136, %v135
    %v142 = vpack.c.b16 %v138, %v137
    %vm147 = vcmask 523264
    %v149 = vsel %vm147, %v121, 0
    %v152 = vsel %vm147, %v122, 0
    %154 = vmatprep.subr.bf16.mxu0 0
    %155 = vmatpush1.bf16.msra.mxu0 %v139
    %156 = vmatprep.subr.bf16.mxu0 0
    %157 = vmatpush1.bf16.msra.mxu0 %v140
    %158 = vmatprep.subr.bf16.mxu0 0
    %159 = vmatpush1.bf16.msra.mxu0 %v141
    %160 = vmatprep.subr.bf16.mxu0 0
    %161 = vmatpush1.bf16.msra.mxu0 %v142
    %162 = vmatprep.subr.bf16.mxu0 0
    %163 = vmatpush1.bf16.msra.mxu0 0
    %164 = vmatprep.subr.bf16.mxu0 0
    %165 = vmatpush1.bf16.msra.mxu0 0
    %166 = vmatprep.subr.bf16.mxu0 0
    %167 = vmatpush1.bf16.msra.mxu0 0
    %168 = vmatprep.subr.bf16.mxu0 0
    %169 = vmatpush1.bf16.msra.mxu0 0
    %170 = vmatprep.subr.bf16.mxu0 0
    %171 = vmatpush1.bf16.msra.mxu0 0
    %172 = vmatprep.subr.bf16.mxu0 0
    %173 = vmatpush1.bf16.msra.mxu0 0
    %174 = vmatprep.subr.bf16.mxu0 0
    %175 = vmatpush1.bf16.msra.mxu0 0
    %176 = vmatprep.subr.bf16.mxu0 0
    %177 = vmatpush1.bf16.msra.mxu0 0
    %178 = vmatprep.subr.bf16.mxu0 0
    %179 = vmatpush1.bf16.msra.mxu0 0
    %180 = vmatprep.subr.bf16.mxu0 0
    %181 = vmatpush1.bf16.msra.mxu0 0
    %182 = vmatprep.subr.bf16.mxu0 0
    %183 = vmatpush1.bf16.msra.mxu0 0
    %184 = vmatprep.subr.bf16.mxu0 0
    %185 = vmatpush1.bf16.msra.mxu0 0
    %186 = vmatprep.mubr.bf16.mxu0 0
    %187 = vmatmul.mubr.bf16.gmra.mrb[0].mxu0 %v149
    %v188 = vpop.f32.mrb[0].mxu0
    %v189 = vadd.f32 %v111, %v188
    %v190 = vpop.f32.mrb[0].mxu0
    %v191 = vpop.f32.mrb[0].mxu0
    %v192 = vadd.f32 %v111, %v191
    %v193 = vpop.f32.mrb[0].mxu0
    %194 = vmatprep.mubr.bf16.mxu0 0
    %195 = vmatmul.mubr.bf16.gmra.mrb[0].mxu0 %v152
    %v196 = vpop.f32.mrb[0].mxu0
    %v197 = vadd.f32 %v111, %v196
    %v198 = vpop.f32.mrb[0].mxu0
    %v199 = vpop.f32.mrb[0].mxu0
    %v200 = vadd.f32 %v111, %v199
    %v201 = vpop.f32.mrb[0].mxu0
    %202 = vdwg.mxu0
    %v203 = vmax.f32 %v189, 0.0
    %v204 = vmax.f32 %v192, 0.0
    %v205 = vmax.f32 %v197, 0.0
    %v206 = vmax.f32 %v200, 0.0
    %v207 = vld [vmem:[#allocation11] sm:$0x3]
    %v208 = vadd.f32 %v203, %v204
    %v209 = vrot.slane %v208, 4
    %v210 = vadd.f32 %v208, %v209
    %v211 = vrot.slane %v210, 2
    %v212 = vadd.f32 %v210, %v211
    %v213 = vrot.slane %v212, 1
    %v214 = vadd.f32 %v212, %v213
    %v215 = vadd.f32 %v205, %v206
    %v216 = vrot.slane %v215, 4
    %v217 = vadd.f32 %v215, %v216
    %v218 = vrot.slane %v217, 2
    %v219 = vadd.f32 %v217, %v218
    %v220 = vrot.slane %v219, 1
    %v221 = vadd.f32 %v219, %v220
    %vm224 = vcmask 1041409
    %v225 = vsel %vm224, %v221, %v214
    %v227 = vadd.f32 %v207, %v225
    %228 = vst [vmem:[#allocation11] sm:$0x3] %v227
    // Predicated region
    $region46: #{image_classifier_forward.1} parent=1 // pred_check
      %p229 = pneg %p89
    $region47: #{image_classifier_forward.1} parent=1 // pred_check_branch
      %231 = sbr.rel (%p229) target = $region49
    $region48: #{image_classifier_forward.1} parent=1 // pred_region
      %v232 = vld [vmem:[#allocation11] sm:$0x3]
      %v233 = vmul.f32 %v232, 0.0625
      %234 = vst [vmem:[#allocation11] sm:$0x3] %v233
      %v235 = vmul.f32 %v233, %v233
      %vm236 = vcmask 1041408
      %v237 = vsel %vm236, %v235, 0.0
      %238 = vadd.xlane.f32.xlu0 %v237
      %v239 = vpop.xlane.xlu0 %238
      %v240 = vadd.f32 %v239, 1e-12
      %v241 = vrsqrt.pop %v240
      %v242 = vmul.f32 %v233, %v241
      %v243 = vpack.c.bf16 %v242, %v242
      %v244 = vld [vmem:[#allocation8] sm:$0xf]
      %v245 = vld [vmem:[#allocation8 + $0x4] sm:$0xf]
      %v246 = vld [vmem:[#allocation8 + $0x8] sm:$0xf]
      %v247 = vld [vmem:[#allocation8 + $0xc] sm:$0xf]
      %v248 = vld [vmem:[#allocation8 + $0x10] sm:$0xf]
      %v249 = vld [vmem:[#allocation8 + $0x14] sm:$0xf]
      %v250 = vld [vmem:[#allocation8 + $0x18] sm:$0xf]
      %v251 = vld [vmem:[#allocation8 + $0x1c] sm:$0xf]
      %v252 = vld [vmem:[#allocation8 + $0x20] sm:$0xf]
      %v253 = vld [vmem:[#allocation8 + $0x24] sm:$0xf]
      %v254 = vld [vmem:[#allocation8 + $0x28] sm:$0xf]
      %v255 = vld [vmem:[#allocation8 + $0x2c] sm:$0xf]
      %v256 = vld [vmem:[#allocation8 + $0x30] sm:$0xf]
      %v257 = vld [vmem:[#allocation8 + $0x34] sm:$0xf]
      %v258 = vld [vmem:[#allocation8 + $0x38] sm:$0xf]
      %v259 = vld [vmem:[#allocation8 + $0x3c] sm:$0xf]
      %v260 = vld [vmem:[#allocation10] sm:$0x1]
      %v262 = vlaneseq
      %v263 = vshrl.u32 %v262, 7
      %v264 = vsub.s32 0, %v263
      %v265 = vrot.slane %v260, %v264
      %v283 = vunpack.c.l.b16 %v244
      %v284 = vunpack.c.l.b16 %v245
      %v285 = vunpack.c.l.b16 %v246
      %v286 = vunpack.c.l.b16 %v247
      %v287 = vunpack.c.l.b16 %v248
      %v288 = vunpack.c.l.b16 %v249
      %v289 = vunpack.c.l.b16 %v250
      %v290 = vunpack.c.l.b16 %v251
      %v291 = vunpack.c.l.b16 %v252
      %v292 = vunpack.c.l.b16 %v253
      %v293 = vunpack.c.l.b16 %v254
      %v294 = vunpack.c.l.b16 %v255
      %v295 = vunpack.c.l.b16 %v256
      %v296 = vunpack.c.l.b16 %v257
      %v297 = vunpack.c.l.b16 %v258
      %v298 = vunpack.c.l.b16 %v259
      %v299 = vpack.c.b16 %v284, %v283
      %v300 = vpack.c.b16 %v286, %v285
      %v301 = vpack.c.b16 %v288, %v287
      %v302 = vpack.c.b16 %v290, %v289
      %v303 = vpack.c.b16 %v292, %v291
      %v304 = vpack.c.b16 %v294, %v293
      %v305 = vpack.c.b16 %v296, %v295
      %v306 = vpack.c.b16 %v298, %v297
      %315 = vmatprep.subr.bf16.mxu0 0
      %316 = vmatpush1.bf16.msra.mxu0 %v299
      %317 = vmatprep.subr.bf16.mxu0 0
      %318 = vmatpush1.bf16.msra.mxu0 %v300
      %319 = vmatprep.subr.bf16.mxu0 0
      %320 = vmatpush1.bf16.msra.mxu0 %v301
      %321 = vmatprep.subr.bf16.mxu0 0
      %322 = vmatpush1.bf16.msra.mxu0 %v302
      %323 = vmatprep.subr.bf16.mxu0 0
      %324 = vmatpush1.bf16.msra.mxu0 %v303
      %325 = vmatprep.subr.bf16.mxu0 0
      %326 = vmatpush1.bf16.msra.mxu0 %v304
      %327 = vmatprep.subr.bf16.mxu0 0
      %328 = vmatpush1.bf16.msra.mxu0 %v305
      %329 = vmatprep.subr.bf16.mxu0 0
      %330 = vmatpush1.bf16.msra.mxu0 %v306
      %331 = vmatprep.subr.bf16.mxu0 0
      %332 = vmatpush1.bf16.msra.mxu0 0
      %333 = vmatprep.subr.bf16.mxu0 0
      %334 = vmatpush1.bf16.msra.mxu0 0
      %335 = vmatprep.subr.bf16.mxu0 0
      %336 = vmatpush1.bf16.msra.mxu0 0
      %337 = vmatprep.subr.bf16.mxu0 0
      %338 = vmatpush1.bf16.msra.mxu0 0
      %339 = vmatprep.subr.bf16.mxu0 0
      %340 = vmatpush1.bf16.msra.mxu0 0
      %341 = vmatprep.subr.bf16.mxu0 0
      %342 = vmatpush1.bf16.msra.mxu0 0
      %343 = vmatprep.subr.bf16.mxu0 0
      %344 = vmatpush1.bf16.msra.mxu0 0
      %345 = vmatprep.subr.bf16.mxu0 0
      %346 = vmatpush1.bf16.msra.mxu0 0
      %347 = vmatprep.mubr.bf16.mxu0 0
      %348 = vmatmul.mubr.bf16.gmra.mrb[0].mxu0 %v243
      %v349 = vpop.f32.mrb[0].mxu0
      %v350 = vadd.f32 %v265, %v349
      %v351 = vpop.f32.mrb[0].mxu0
      %v352 = vpop.f32.mrb[0].mxu0
      %v353 = vpop.f32.mrb[0].mxu0
      %354 = vdwg.mxu0
      %355 = vst [vmem:[#allocation12] sm:$0x3] %v350
    $region49: #{image_classifier_forward.1} parent=1 // pred_fallthru
      _
    // Predicated region
    $region50: #{image_classifier_forward.1} parent=1 // pred_check
      _
    $region51: #{image_classifier_forward.1} parent=1 // pred_check_branch
      %357 = sbr.rel (0) target = $region53
    $region52: #{image_classifier_forward.1} parent=1 // pred_region
      %s359 = ssub.s32 32, 32
      %360 = vsyncadd [#allocation4], %s359
      %s362 = sshll.u32 [#allocation11], 4
      %s363 = int_to_ptr.vmem [resolvable:$true] %s362
      %365 = dma.vmem_to_hbm [thread:$0]  %s363, 32, %s5, [#allocation4]
    $region53: #{image_classifier_forward.1} parent=1 // pred_fallthru
      _
    // Predicated region
    $region54: #{image_classifier_forward.1} parent=1 // pred_check
      _
    $region55: #{image_classifier_forward.1} parent=1 // pred_check_branch
      %367 = sbr.rel (0) target = $region57
    $region56: #{image_classifier_forward.1} parent=1 // pred_region
      %s369 = ssub.s32 32, 32
      %370 = vsyncadd [#allocation13], %s369
      %s372 = sshll.u32 [#allocation12], 4
      %s373 = int_to_ptr.vmem [resolvable:$true] %s372
      %375 = dma.vmem_to_hbm [thread:$0]  %s373, 32, %s6, [#allocation13]
    $region57: #{image_classifier_forward.1} parent=1 // pred_fallthru
      _
    // Predicated region
    $region58: #{image_classifier_forward.1} parent=1 // pred_check
      _
    $region59: #{image_classifier_forward.1} parent=1 // pred_check_branch
      %377 = sbr.rel (0) target = $region61
    $region60: #{image_classifier_forward.1} parent=1 // pred_region
      %378 = dma.done [#allocation4], 32
    $region61: #{image_classifier_forward.1} parent=1 // pred_fallthru
      _
    // Predicated region
    $region62: #{image_classifier_forward.1} parent=1 // pred_check
      _
    $region63: #{image_classifier_forward.1} parent=1 // pred_check_branch
      %380 = sbr.rel (0) target = $region65
    $region64: #{image_classifier_forward.1} parent=1 // pred_region
      %381 = dma.done [#allocation13], 32
    $region65: #{image_classifier_forward.1} parent=1 // pred_fallthru
      _
    %382 = vsyncpa [#allocation3], 1
    %383 = vsyncpa [#allocation6], 1
    %384 = vsyncpa [#allocation9], 1
    %385 = vsyncpa [#allocation4], 1
    %386 = vsyncpa [#allocation13], 1

</llo_original>
